<compile_context>
chip_gen: v7x
topology: tpu7x:2x2x1
jax: 0.10.0
libtpu: 0.0.40
codegen_flags: <defaults>
</compile_context>

<pallas_src>
import math

import jax
import jax.numpy as jnp
from jax.experimental import pallas as pl
from jax.experimental.pallas import tpu as pltpu


def _layer_scale_kernel(x_ref, gamma_ref, o_ref):
    # x_ref: (tile_rows, td) in x.dtype; gamma_ref: (1, td) f32.
    x = x_ref[...].astype(jnp.float32)
    o_ref[...] = (x * gamma_ref[...]).astype(o_ref.dtype)


def _sublane(dtype) -> int:
    # Native second-to-last-dim packing: 8 rows f32, 16 bf16, 32 int8/fp8.
    return {4: 8, 2: 16, 1: 32}.get(jnp.dtype(dtype).itemsize, 8)


def _choose_fold(rows: int, dim: int) -> int:
    """Fold consecutive rows into the lane axis so the folded feature dim is a
    multiple of 128 (lane-dense, unmasked stores). Returns 1 when not useful
    or not possible (rows not divisible by the required factor)."""
    if dim % 128 == 0:
        return 1
    k0 = 128 // math.gcd(dim, 128)  # smallest k with (k*dim) % 128 == 0
    if rows % k0 != 0:
        return 1
    fold = k0
    # Grow toward ~512 lanes while it still evenly divides `rows`.
    while fold * dim < 512 and fold * 2 * dim <= 4096 and rows % (fold * 2) == 0:
        fold *= 2
    return fold


def layer_scale(x: jax.Array, gamma: jax.Array, *,
                target_tile_bytes: int = 2 * 1024 * 1024) -> jax.Array:
    """y = x * gamma, gamma broadcast over all leading dims of x."""
    orig_shape = x.shape
    dim = orig_shape[-1]
    assert gamma.shape == (dim,), f"gamma must be ({dim},), got {gamma.shape}"

    rows = 1
    for s in orig_shape[:-1]:
        rows *= int(s)
    rows = max(rows, 1)

    itemsize = jnp.dtype(x.dtype).itemsize
    sublane = _sublane(x.dtype)

    # ---- layout: flatten leading dims, optionally fold rows into lanes ----
    fold = _choose_fold(rows, dim)
    rows_f = rows // fold
    feat = fold * dim

    x2d = x.reshape(rows_f, feat)
    gamma_f32 = gamma.astype(jnp.float32)
    gamma2d = (jnp.tile(gamma_f32, fold) if fold > 1 else gamma_f32).reshape(1, feat)

    # ---- feature-axis tile: keep lane dim a multiple of 128, cap size ----
    if feat % 128 == 0:
        td = min(feat, 2048)
    else:
        td = feat  # full extent is always a legal block shape

    # ---- row tile: target ~target_tile_bytes per x/out tile ----
    if rows_f <= sublane:
        tile_rows = rows_f  # full extent (always legal)
    else:
        budget_rows = (target_tile_bytes // (td * itemsize)) // sublane * sublane
        budget_rows = max(budget_rows, sublane)
        tile_rows = min(budget_rows, (rows_f // sublane) * sublane)

    grid = (pl.cdiv(rows_f, tile_rows), pl.cdiv(feat, td))

    out2d = pl.pallas_call(
        _layer_scale_kernel,
        out_shape=jax.ShapeDtypeStruct((rows_f, feat), x.dtype),
        grid_spec=pltpu.PrefetchScalarGridSpec(
            num_scalar_prefetch=0,
            grid=grid,
            in_specs=[
                pl.BlockSpec((tile_rows, td), lambda i, j: (i, j)),
                pl.BlockSpec((1, td), lambda i, j: (0, j)),
            ],
            out_specs=pl.BlockSpec((tile_rows, td), lambda i, j: (i, j)),
        ),
        compiler_params=pltpu.CompilerParams(
            dimension_semantics=("parallel", "parallel"),
            vmem_limit_bytes=48 * 1024 * 1024,
        ),
    )(x2d, gamma2d)

    # TODO(synk): for peak perf this multiply should be fused into the
    # producing projection kernel (or aliased in-place) to avoid the extra
    # HBM round trip of a standalone elementwise op.
    return out2d.reshape(orig_shape)


if __name__ == "__main__":
    key = jax.random.PRNGKey(0)
    init_values = 1e-5

    # Case 1: typical small ViT-token layout, f32, dim=32 (lane-fold path).
    dim = 32
    gamma = init_values * jnp.ones((dim,), dtype=jnp.float32)
    x1 = jax.random.normal(key, (2, 8, dim), dtype=jnp.float32)
    y1 = layer_scale(x1, gamma)
    jax.block_until_ready(y1)
    assert y1.shape == x1.shape
    assert jnp.allclose(y1, x1 * gamma, atol=1e-6, rtol=1e-6)

    # Case 2: bf16 activations, f32 gamma applied in f32 before downcast.
    x2 = x1.astype(jnp.bfloat16)
    y2 = layer_scale(x2, gamma)
    jax.block_until_ready(y2)
    y2_ref = (x2.astype(jnp.float32) * gamma).astype(jnp.bfloat16)
    assert y2.shape == x2.shape
    assert jnp.allclose(y2.astype(jnp.float32), y2_ref.astype(jnp.float32),
                        atol=1e-7, rtol=1e-2)

    # Case 3: ragged row count + non-128 dim with no clean fold (masked path).
    dim3 = 96
    gamma3 = init_values * jnp.ones((dim3,), dtype=jnp.float32)
    x3 = jax.random.normal(jax.random.PRNGKey(0), (3, 5, dim3), dtype=jnp.float32)
    y3 = layer_scale(x3, gamma3)
    jax.block_until_ready(y3)
    assert y3.shape == x3.shape
    assert jnp.allclose(y3, x3 * gamma3, atol=1e-6, rtol=1e-6)

    print("KERNEL_OK")
</pallas_src>

<mosaic_0001>
module attributes {stable_mosaic.version = 11 : i64} {
  func.func @_layer_scale_kernel(%arg0: i32, %arg1: i32, %arg2: memref<1x512xf32, #tpu.memory_space<vmem>>, %arg3: memref<1x512xf32, #tpu.memory_space<vmem>>, %arg4: memref<1x512xf32, #tpu.memory_space<vmem>>) attributes {dimension_semantics = [#tpu.dimension_semantics<parallel>, #tpu.dimension_semantics<parallel>], iteration_bounds = array<i64: 1, 1>, scalar_prefetch = 0 : i64, scratch_operands = 0 : i64, tpu.core_type = #tpu.core_type<tc>, window_params = [{transform_indices = @transform_0, window_bounds = array<i64: 1, 512>}, {transform_indices = @transform_1, window_bounds = array<i64: 1, 512>}, {transform_indices = @transform_2, window_bounds = array<i64: 1, 512>}]} {
    %c0 = arith.constant 0 : index
    %c0_0 = arith.constant 0 : index
    %0 = vector.load %arg2[%c0, %c0_0] : memref<1x512xf32, #tpu.memory_space<vmem>>, vector<1x512xf32>
    %c0_1 = arith.constant 0 : index
    %c0_2 = arith.constant 0 : index
    %1 = vector.load %arg3[%c0_1, %c0_2] : memref<1x512xf32, #tpu.memory_space<vmem>>, vector<1x512xf32>
    %2 = arith.mulf %0, %1 : vector<1x512xf32>
    %c0_3 = arith.constant 0 : index
    %c0_4 = arith.constant 0 : index
    %3 = vector.load %arg4[%c0_3, %c0_4] : memref<1x512xf32, #tpu.memory_space<vmem>>, vector<1x512xf32>
    tpu.vector_store %arg4[%c0_3, %c0_4], %2 {strides = array<i32>} : memref<1x512xf32, #tpu.memory_space<vmem>>, vector<1x512xf32>,
    return
  }
  func.func @transform_0(%arg0: i32, %arg1: i32) -> (i32, i32) {
    %c0_i32 = arith.constant 0 : i32
    return %arg0, %arg1 : i32, i32
  }
  func.func @transform_1(%arg0: i32, %arg1: i32) -> (i32, i32) {
    %c0_i32 = arith.constant 0 : i32
    %c0_i32_0 = arith.constant 0 : i32
    return %c0_i32, %arg1 : i32, i32
  }
  func.func @transform_2(%arg0: i32, %arg1: i32) -> (i32, i32) {
    %c0_i32 = arith.constant 0 : i32
    return %arg0, %arg1 : i32, i32
  }
}

</mosaic_0001>

<llo_original>
// kernel: tpu_custom_call.1
$region0: #{tpu_custom_call.1}
  #allocation0 [shape = 'u32[]', space=smem, size = 0x4, offset = 0x4, fixed_abs, tag = 'smem constant byte address 0x4 - core index']
  #allocation1 [shape = 'u32[144,128]{1,0:T(1,128)}', space=vmem, size = 0x12000, scoped, tag = 'internal scratch']
  %s0 = inlined_call_operand.hbm [shape: f32[1,512], index: 0, kind: input, shape index: {}]
  %s1 = inlined_call_operand.hbm [shape: f32[1,512], index: 1, kind: input, shape index: {}]
  %s2 = inlined_call_operand.hbm [shape: f32[1,512], index: 2, kind: output, shape index: {}]
  %s3 = sld [smem:[#allocation0]]
  $region26: #{tpu_custom_call.1} parent=0
    _
  %s5 = ssub.s32 1, %s3
  %s6 = scalar_select 0, %s5, %s3
  $region1: #{tpu_custom_call.1} parent=0
    #allocation2 [shape = 'u8[2048]{0}', space=vmem, size = 0x800, scoped, tag = 'input window, operand 0, single buffered']
    #allocation3 [shape = 's32[1]{0}', space=sflag, size = 0x4, scoped, tag = 'scoped memory for tpu_custom_call.1']
    #allocation4 [shape = 's32[1]{0}', space=sflag, size = 0x4, scoped, tag = 'scoped memory for tpu_custom_call.1']
    #allocation5 [shape = 'u8[2048]{0}', space=vmem, size = 0x800, scoped, tag = 'input window, operand 1, single buffered']
    #allocation6 [shape = 's32[1]{0}', space=sflag, size = 0x4, scoped, tag = 'scoped memory for tpu_custom_call.1']
    #allocation7 [shape = 'u8[2048]{0}', space=vmem, size = 0x800, scoped, tag = 'output window, operand 0, single buffered']
    %7 = vsyncpa [#allocation3], 0
    %8 = vsyncpa [#allocation6], 0
    %9 = vsyncpa [#allocation4], 0
    // Predicated region
    $region2: #{tpu_custom_call.1} parent=1 // pred_check
      _
    $region3: #{tpu_custom_call.1} parent=1 // pred_check_branch
      %11 = sbr.rel (0) target = $region5
    $region4: #{tpu_custom_call.1} parent=1 // pred_region
      %s13 = ssub.s32 64, 64
      %14 = vsyncadd [#allocation3], %s13
      %s16 = sshll.u32 [#allocation2], 4
      %s17 = int_to_ptr.vmem [resolvable:$true] %s16
      %19 = dma.hbm_to_vmem [thread:$0]  %s0, 64, %s17, [#allocation3]
    $region5: #{tpu_custom_call.1} parent=1 // pred_fallthru
      _
    // Predicated region
    $region6: #{tpu_custom_call.1} parent=1 // pred_check
      _
    $region7: #{tpu_custom_call.1} parent=1 // pred_check_branch
      %21 = sbr.rel (0) target = $region9
    $region8: #{tpu_custom_call.1} parent=1 // pred_region
      %s23 = ssub.s32 64, 64
      %24 = vsyncadd [#allocation6], %s23
      %s26 = sshll.u32 [#allocation5], 4
      %s27 = int_to_ptr.vmem [resolvable:$true] %s26
      %29 = dma.hbm_to_vmem [thread:$0]  %s1, 64, %s27, [#allocation6]
    $region9: #{tpu_custom_call.1} parent=1 // pred_fallthru
      _
    // Predicated region
    $region10: #{tpu_custom_call.1} parent=1 // pred_check
      _
    $region11: #{tpu_custom_call.1} parent=1 // pred_check_branch
      %31 = sbr.rel (0) target = $region13
    $region12: #{tpu_custom_call.1} parent=1 // pred_region
      %32 = dma.done [#allocation3], 64
    $region13: #{tpu_custom_call.1} parent=1 // pred_fallthru
      _
    // Predicated region
    $region14: #{tpu_custom_call.1} parent=1 // pred_check
      _
    $region15: #{tpu_custom_call.1} parent=1 // pred_check_branch
      %34 = sbr.rel (0) target = $region17
    $region16: #{tpu_custom_call.1} parent=1 // pred_region
      %35 = dma.done [#allocation6], 64
    $region17: #{tpu_custom_call.1} parent=1 // pred_fallthru
      _
    %v36 = vld [vmem:[#allocation2] sm:$0xf]
    %v37 = vld [vmem:[#allocation5] sm:$0xf]
    %v38 = vmul.f32 %v36, %v37
    %v39 = vlaneseq
    %vm40 = vcmp.ge.s32.totalorder %v39, 0
    %vm41 = vcmp.lt.s32.totalorder %v39, 512
    %vm42 = vmand %vm40, %vm41
    %43 = vst.msk [vmem:[#allocation7] sm:$0xf] %vm42, %v38
    // Predicated region
    $region18: #{tpu_custom_call.1} parent=1 // pred_check
      _
    $region19: #{tpu_custom_call.1} parent=1 // pred_check_branch
      %45 = sbr.rel (0) target = $region21
    $region20: #{tpu_custom_call.1} parent=1 // pred_region
      %s47 = ssub.s32 64, 64
      %48 = vsyncadd [#allocation4], %s47
      %s50 = sshll.u32 [#allocation7], 4
      %s51 = int_to_ptr.vmem [resolvable:$true] %s50
      %53 = dma.vmem_to_hbm [thread:$0]  %s51, 64, %s2, [#allocation4]
    $region21: #{tpu_custom_call.1} parent=1 // pred_fallthru
      _
    // Predicated region
    $region22: #{tpu_custom_call.1} parent=1 // pred_check
      _
    $region23: #{tpu_custom_call.1} parent=1 // pred_check_branch
      %55 = sbr.rel (0) target = $region25
    $region24: #{tpu_custom_call.1} parent=1 // pred_region
      %56 = dma.done [#allocation4], 64
    $region25: #{tpu_custom_call.1} parent=1 // pred_fallthru
      _
    %57 = vsyncpa [#allocation3], 1
    %58 = vsyncpa [#allocation6], 1
    %59 = vsyncpa [#allocation4], 1

</llo_original>
